<compile_context>
chip_gen: v7x
topology: tpu7x:2x2x1
jax: 0.10.0
libtpu: 0.0.40
codegen_flags: <defaults>
</compile_context>

<pallas_src>
import functools

import jax
import jax.numpy as jnp
from jax.experimental import pallas as pl
from jax.experimental.pallas import tpu as pltpu


def _ffn_kernel(x_ref, wgu_ref, wd_ref, o_ref, acc_ref, *, ti):
    # x_ref:   (TM, H)       token tile            (bf16)
    # wgu_ref: (H, 2*TI)     packed [gate_k | up_k] weight tile (bf16)
    # wd_ref:  (TI, H)       down_proj weight tile (bf16)
    # o_ref:   (TM, H)       output tile
    # acc_ref: (TM, H) f32   accumulator over the intermediate (k) axis
    k = pl.program_id(1)

    @pl.when(k == 0)
    def _():
        acc_ref[...] = jnp.zeros_like(acc_ref)

    # Fused gate/up projection: one MXU pass of the x tile against the packed
    # weights, bf16 operands with f32 accumulation.
    gu = jnp.dot(x_ref[...], wgu_ref[...], preferred_element_type=jnp.float32)
    g = gu[:, :ti]
    u = gu[:, ti:]

    # SiLU in f32 (sigmoid -> EUP, multiplies -> VPU); keep f32 for v5e which
    # has no bf16 VPU/EUP.  Cast to bf16 only for the down-projection matmul.
    h = (g * jax.nn.sigmoid(g)) * u

    acc_ref[...] += jnp.dot(h.astype(wd_ref.dtype), wd_ref[...],
                            preferred_element_type=jnp.float32)

    @pl.when(k == pl.num_programs(1) - 1)
    def _():
        o_ref[...] = acc_ref[...].astype(o_ref.dtype)


def _round_up(x, m):
    return ((x + m - 1) // m) * m


def _default_vmem_limit():
    # Size the scoped VMEM limit to the chip (128 MiB on v5e/v6e, 64 MiB on
    # v7x) while leaving headroom for compiler-internal scratch.
    try:
        cap = pltpu.get_tpu_info().vmem_capacity_bytes
    except Exception:
        cap = 64 * 1024 * 1024
    return max(32 * 1024 * 1024, cap - 16 * 1024 * 1024)


def feed_forward(x, w_gate, w_up, w_down, *,
                 token_tile=256, intermediate_tile=1024,
                 vmem_limit_bytes=None):
    """SwiGLU FFN: down_proj( silu(x @ Wg) * (x @ Wu) ).

    x: (batch, seq, hidden).  Weights pre-transposed: (in_features, out_features),
    matching nn.Linear(in, out, bias=False) applied to the last dim of x.
    Dropout is eval-mode identity.
    """
    B, S, H = x.shape
    I = w_gate.shape[1]
    T = B * S

    # ---- tile sizing -------------------------------------------------------
    tm = min(token_tile, _round_up(T, 8))      # token tile (>=8-row aligned)
    t_pad = _round_up(T, tm)                   # pad ragged token counts
    ti = min(intermediate_tile, I)             # intermediate tile
    assert I % ti == 0, "intermediate_size must be divisible by intermediate_tile"
    n_t = t_pad // tm
    n_i = I // ti

    if vmem_limit_bytes is None:
        vmem_limit_bytes = _default_vmem_limit()

    # ---- operand prep: bf16 MXU operands, padded tokens, packed gate|up ----
    x2d = x.reshape(T, H).astype(jnp.bfloat16)
    if t_pad != T:
        x2d = jnp.pad(x2d, ((0, t_pad - T), (0, 0)))

    # Pack gate/up so the k-th block of width 2*ti is [gate_k | up_k].
    w_gu = jnp.concatenate(
        [w_gate.astype(jnp.bfloat16).reshape(H, n_i, ti),
         w_up.astype(jnp.bfloat16).reshape(H, n_i, ti)],
        axis=2,
    ).reshape(H, 2 * I)
    w_d = w_down.astype(jnp.bfloat16)

    cost = pl.CostEstimate(
        flops=6 * T * H * I,
        transcendentals=T * I,
        bytes_accessed=(x2d.size * 2 + w_gu.size * 2 + w_d.size * 2
                        + T * H * x.dtype.itemsize),
    )

    out2d = pl.pallas_call(
        functools.partial(_ffn_kernel, ti=ti),
        out_shape=jax.ShapeDtypeStruct((t_pad, H), x.dtype),
        grid_spec=pltpu.PrefetchScalarGridSpec(
            num_scalar_prefetch=0,
            grid=(n_t, n_i),
            in_specs=[
                pl.BlockSpec((tm, H), lambda i, k: (i, 0)),      # x tile
                pl.BlockSpec((H, 2 * ti), lambda i, k: (0, k)),  # [gate|up] tile
                pl.BlockSpec((ti, H), lambda i, k: (k, 0)),      # down tile
            ],
            out_specs=pl.BlockSpec((tm, H), lambda i, k: (i, 0)),
            scratch_shapes=[pltpu.VMEM((tm, H), jnp.float32)],
        ),
        compiler_params=pltpu.CompilerParams(
            dimension_semantics=("parallel", "arbitrary"),
            vmem_limit_bytes=vmem_limit_bytes,
        ),
        cost_estimate=cost,
    )(x2d, w_gu, w_d)

    return out2d[:T].reshape(B, S, H)


def feed_forward_reference(x, w_gate, w_up, w_down):
    # bf16-operand / f32-accumulate reference matching the kernel's precision.
    xb = x.astype(jnp.bfloat16).astype(jnp.float32)
    wg = w_gate.astype(jnp.bfloat16).astype(jnp.float32)
    wu = w_up.astype(jnp.bfloat16).astype(jnp.float32)
    wd = w_down.astype(jnp.bfloat16).astype(jnp.float32)
    g = xb @ wg
    u = xb @ wu
    h = (g * jax.nn.sigmoid(g)) * u
    h = h.astype(jnp.bfloat16).astype(jnp.float32)
    return (h @ wd).astype(x.dtype)


if __name__ == "__main__":
    # Config (small, consistent with the module's __init__ arithmetic):
    #   hidden_size = 32
    #   intermediate_size = 64 * ceil(int(32 * 8 / 3) / 64) = 128
    hidden_size = 32
    intermediate_size = 64 * ((int(hidden_size * 8 / 3) + 64 - 1) // 64)  # 128

    batch, seq = 2, 8

    key = jax.random.PRNGKey(0)
    kx, kg, ku, kd = jax.random.split(key, 4)

    x = jax.random.normal(kx, (batch, seq, hidden_size), dtype=jnp.float32)

    # Deterministic weight init (roughly Linear-style scaling), stored (in, out).
    w_gate = jax.random.normal(kg, (hidden_size, intermediate_size),
                               dtype=jnp.float32) * (1.0 / hidden_size ** 0.5)
    w_up = jax.random.normal(ku, (hidden_size, intermediate_size),
                             dtype=jnp.float32) * (1.0 / hidden_size ** 0.5)
    w_down = jax.random.normal(kd, (intermediate_size, hidden_size),
                               dtype=jnp.float32) * (1.0 / intermediate_size ** 0.5)

    out = feed_forward(x, w_gate, w_up, w_down)
    out = jax.block_until_ready(out)

    ref = feed_forward_reference(x, w_gate, w_up, w_down)
    assert out.shape == (batch, seq, hidden_size)
    assert jnp.allclose(out, ref, atol=1e-2, rtol=1e-2), "mismatch vs reference"

    print("KERNEL_OK")
</pallas_src>

<mosaic_0001>
module attributes {stable_mosaic.version = 11 : i64} {
  func.func @_ffn_kernel(%arg0: i32, %arg1: i32, %arg2: memref<16x32xbf16, #tpu.memory_space<vmem>>, %arg3: memref<32x256xbf16, #tpu.memory_space<vmem>>, %arg4: memref<128x32xbf16, #tpu.memory_space<vmem>>, %arg5: memref<16x32xf32, #tpu.memory_space<vmem>>, %arg6: memref<16x32xf32, #tpu.memory_space<vmem>>) attributes {dimension_semantics = [#tpu.dimension_semantics<parallel>, #tpu.dimension_semantics<arbitrary>], iteration_bounds = array<i64: 1, 1>, scalar_prefetch = 0 : i64, scratch_operands = 1 : i64, tpu.core_type = #tpu.core_type<tc>, window_params = [{transform_indices = @transform_0, window_bounds = array<i64: 16, 32>}, {transform_indices = @transform_1, window_bounds = array<i64: 32, 256>}, {transform_indices = @transform_2, window_bounds = array<i64: 128, 32>}, {transform_indices = @transform_3, window_bounds = array<i64: 16, 32>}]} {
    %c0_i32 = arith.constant 0 : i32
    %0 = arith.cmpi eq, %arg1, %c0_i32 : i32
    %1 = arith.extui %0 : i1 to i32
    %c0_i32_0 = arith.constant 0 : i32
    %2 = arith.cmpi ne, %1, %c0_i32_0 : i32
    scf.if %2 {
      %cst_14 = arith.constant 0.000000e+00 : f32
      %24 = vector.broadcast %cst_14 : f32 to vector<16x32xf32>
      %c0_15 = arith.constant 0 : index
      %c0_16 = arith.constant 0 : index
      %25 = vector.load %arg6[%c0_15, %c0_16] : memref<16x32xf32, #tpu.memory_space<vmem>>, vector<16x32xf32>
      tpu.vector_store %arg6[%c0_15, %c0_16], %24 {strides = array<i32>} : memref<16x32xf32, #tpu.memory_space<vmem>>, vector<16x32xf32>,
    } else {
    }
    %c0 = arith.constant 0 : index
    %c0_1 = arith.constant 0 : index
    %3 = vector.load %arg2[%c0, %c0_1] : memref<16x32xbf16, #tpu.memory_space<vmem>>, vector<16x32xbf16>
    %c0_2 = arith.constant 0 : index
    %c0_3 = arith.constant 0 : index
    %4 = vector.load %arg3[%c0_2, %c0_3] : memref<32x256xbf16, #tpu.memory_space<vmem>>, vector<32x256xbf16>
    %cst = arith.constant dense<0.000000e+00> : vector<16x256xf32>
    %5 = tpu.matmul %3, %4, %cst {dimension_numbers = #tpu.dot_dimension_numbers<[1], [0], [0], [1], [0, 0, 1, 1], [], []>} : vector<16x32xbf16>, vector<32x256xbf16>, vector<16x256xf32> -> vector<16x256xf32>
    %6 = vector.extract_strided_slice %5 {offsets = [0, 0], sizes = [16, 128], strides = [1, 1]} : vector<16x256xf32> to vector<16x128xf32>
    %7 = vector.extract_strided_slice %5 {offsets = [0, 128], sizes = [16, 128], strides = [1, 1]} : vector<16x256xf32> to vector<16x128xf32>
    %8 = arith.negf %6 : vector<16x128xf32>
    %9 = math.exp %8 : vector<16x128xf32>
    %cst_4 = arith.constant 1.000000e+00 : f32
    %10 = vector.broadcast %cst_4 : f32 to vector<16x128xf32>
    %11 = arith.addf %10, %9 : vector<16x128xf32>
    %12 = arith.divf %10, %11 : vector<16x128xf32>
    %13 = arith.mulf %6, %12 : vector<16x128xf32>
    %14 = arith.mulf %13, %7 : vector<16x128xf32>
    %c0_5 = arith.constant 0 : index
    %c0_6 = arith.constant 0 : index
    %15 = vector.load %arg6[%c0_5, %c0_6] : memref<16x32xf32, #tpu.memory_space<vmem>>, vector<16x32xf32>
    %16 = arith.truncf %14 : vector<16x128xf32> to vector<16x128xbf16>
    %c0_7 = arith.constant 0 : index
    %c0_8 = arith.constant 0 : index
    %17 = vector.load %arg4[%c0_7, %c0_8] : memref<128x32xbf16, #tpu.memory_space<vmem>>, vector<128x32xbf16>
    %cst_9 = arith.constant dense<0.000000e+00> : vector<16x32xf32>
    %18 = tpu.matmul %16, %17, %cst_9 {dimension_numbers = #tpu.dot_dimension_numbers<[1], [0], [0], [1], [0, 0, 1, 1], [], []>} : vector<16x128xbf16>, vector<128x32xbf16>, vector<16x32xf32> -> vector<16x32xf32>
    %19 = arith.addf %15, %18 : vector<16x32xf32>
    %c0_10 = arith.constant 0 : index
    %c0_11 = arith.constant 0 : index
    %20 = vector.load %arg6[%c0_10, %c0_11] : memref<16x32xf32, #tpu.memory_space<vmem>>, vector<16x32xf32>
    tpu.vector_store %arg6[%c0_10, %c0_11], %19 {strides = array<i32>} : memref<16x32xf32, #tpu.memory_space<vmem>>, vector<16x32xf32>,
    %c0_i32_12 = arith.constant 0 : i32
    %21 = arith.cmpi eq, %arg1, %c0_i32_12 : i32
    %22 = arith.extui %21 : i1 to i32
    %c0_i32_13 = arith.constant 0 : i32
    %23 = arith.cmpi ne, %22, %c0_i32_13 : i32
    scf.if %23 {
      %c0_14 = arith.constant 0 : index
      %c0_15 = arith.constant 0 : index
      %24 = vector.load %arg6[%c0_14, %c0_15] : memref<16x32xf32, #tpu.memory_space<vmem>>, vector<16x32xf32>
      %c0_16 = arith.constant 0 : index
      %c0_17 = arith.constant 0 : index
      %25 = vector.load %arg5[%c0_16, %c0_17] : memref<16x32xf32, #tpu.memory_space<vmem>>, vector<16x32xf32>
      tpu.vector_store %arg5[%c0_16, %c0_17], %24 {strides = array<i32>} : memref<16x32xf32, #tpu.memory_space<vmem>>, vector<16x32xf32>,
    } else {
    }
    return
  }
  func.func @transform_0(%arg0: i32, %arg1: i32) -> (i32, i32) {
    %c0_i32 = arith.constant 0 : i32
    %c0_i32_0 = arith.constant 0 : i32
    return %arg0, %c0_i32 : i32, i32
  }
  func.func @transform_1(%arg0: i32, %arg1: i32) -> (i32, i32) {
    %c0_i32 = arith.constant 0 : i32
    %c0_i32_0 = arith.constant 0 : i32
    return %c0_i32, %arg1 : i32, i32
  }
  func.func @transform_2(%arg0: i32, %arg1: i32) -> (i32, i32) {
    %c0_i32 = arith.constant 0 : i32
    %c0_i32_0 = arith.constant 0 : i32
    return %arg1, %c0_i32 : i32, i32
  }
  func.func @transform_3(%arg0: i32, %arg1: i32) -> (i32, i32) {
    %c0_i32 = arith.constant 0 : i32
    %c0_i32_0 = arith.constant 0 : i32
    return %arg0, %c0_i32 : i32, i32
  }
}

</mosaic_0001>

<llo_original>
// kernel: tpu_custom_call.1
$region0: #{tpu_custom_call.1}
  #allocation0 [shape = 'u32[]', space=smem, size = 0x4, offset = 0x4, fixed_abs, tag = 'smem constant byte address 0x4 - core index']
  #allocation1 [shape = 'u32[144,128]{1,0:T(1,128)}', space=vmem, size = 0x12000, scoped, tag = 'internal scratch']
  #allocation2 [shape = 'f32[16,32]{1,0:T(8,128)}', space=vmem, size = 0x2000, scoped, tag = 'scratch operand']
  %s0 = inlined_call_operand.vmem [shape: bf16[16,32], index: 0, kind: input, shape index: {}]
  %s1 = inlined_call_operand.vmem [shape: bf16[32,256], index: 1, kind: input, shape index: {}]
  %s2 = inlined_call_operand.vmem [shape: bf16[128,32], index: 2, kind: input, shape index: {}]
  %s3 = inlined_call_operand.hbm [shape: f32[16,32], index: 3, kind: output, shape index: {}]
  %s4 = sld [smem:[#allocation0]]
  $region30: #{tpu_custom_call.1} parent=0
    _
  %s6 = ssub.s32 1, %s4
  %s7 = scalar_select 0, %s6, %s4
  $region1: #{tpu_custom_call.1} parent=0
    #allocation3 [shape = 'u8[8192]{0}', space=vmem, size = 0x2000, scoped, tag = 'output window, operand 0, single buffered']
    #allocation4 [shape = 's32[1]{0}', space=sflag, size = 0x4, scoped, tag = 'scoped memory for tpu_custom_call.1']
    %8 = vsyncpa [#allocation4], 0
    // Predicated region
    $region2: #{tpu_custom_call.1} parent=1 // pred_check
      _
    $region3: #{tpu_custom_call.1} parent=1 // pred_check_branch
      %10 = sbr.rel (0) target = $region5
    $region4: #{tpu_custom_call.1} parent=1 // pred_region
      _
    $region5: #{tpu_custom_call.1} parent=1 // pred_fallthru
      _
    // Predicated region
    $region6: #{tpu_custom_call.1} parent=1 // pred_check
      _
    $region7: #{tpu_custom_call.1} parent=1 // pred_check_branch
      %12 = sbr.rel (0) target = $region9
    $region8: #{tpu_custom_call.1} parent=1 // pred_region
      _
    $region9: #{tpu_custom_call.1} parent=1 // pred_fallthru
      _
    // Predicated region
    $region10: #{tpu_custom_call.1} parent=1 // pred_check
      _
    $region11: #{tpu_custom_call.1} parent=1 // pred_check_branch
      %14 = sbr.rel (0) target = $region13
    $region12: #{tpu_custom_call.1} parent=1 // pred_region
      _
    $region13: #{tpu_custom_call.1} parent=1 // pred_fallthru
      _
    %p16 = scmp.eq.s32.totalorder 0, 0
    // Predicated region
    $region14: #{tpu_custom_call.1} parent=1 // pred_check
      %p17 = pneg %p16
    $region15: #{tpu_custom_call.1} parent=1 // pred_check_branch
      %19 = sbr.rel (%p17) target = $region17
    $region16: #{tpu_custom_call.1} parent=1 // pred_region
      %vm20 = vcmask 261120
      %21 = vst.msk [vmem:[#allocation2] sm:$0xff] %vm20, 0.0
      %22 = vst.msk [vmem:[#allocation2 + $0x8] sm:$0xff] %vm20, 0.0
    $region17: #{tpu_custom_call.1} parent=1 // pred_fallthru
      _
    %v23 = vld [vmem:[%s0] sm:$0xf]
    %v24 = vld [vmem:[%s0 + $0x4] sm:$0xf]
    %v25 = vld [vmem:[%s1] sm:$0xff]
    %v26 = vld [vmem:[%s1 + $0x8] sm:$0xff]
    %v27 = vld [vmem:[%s1 + $0x10] sm:$0xff]
    %v28 = vld [vmem:[%s1 + $0x18] sm:$0xff]
    %v31 = vunpack.c.l.b16 %v23
    %v32 = vunpack.c.l.b16 %v24
    %v33 = vpack.c.b16 %v32, %v31
    %v38 = vunpack.c.l.b16 %v25
    %v39 = vunpack.c.h.b16 %v25
    %v40 = vunpack.c.l.b16 %v26
    %v41 = vunpack.c.h.b16 %v26
    %v42 = vunpack.c.l.b16 %v27
    %v43 = vunpack.c.h.b16 %v27
    %v44 = vunpack.c.l.b16 %v28
    %v45 = vunpack.c.h.b16 %v28
    %v46 = vpack.c.b16 %v40, %v38
    %v47 = vpack.c.b16 %v41, %v39
    %v48 = vpack.c.b16 %v44, %v42
    %v49 = vpack.c.b16 %v45, %v43
    %vm54 = vcmask 261120
    %v56 = vsel %vm54, %v33, 0
    %58 = vmatprep.subr.bf16.mxu0 %v47
    %59 = vmatpush1.bf16.msra.mxu0 %v46
    %60 = vmatprep.subr.bf16.mxu0 %v49
    %61 = vmatpush1.bf16.msra.mxu0 %v48
    %62 = vmatprep.subr.bf16.mxu0 0
    %63 = vmatpush1.bf16.msra.mxu0 0
    %64 = vmatprep.subr.bf16.mxu0 0
    %65 = vmatpush1.bf16.msra.mxu0 0
    %66 = vmatprep.subr.bf16.mxu0 0
    %67 = vmatpush1.bf16.msra.mxu0 0
    %68 = vmatprep.subr.bf16.mxu0 0
    %69 = vmatpush1.bf16.msra.mxu0 0
    %70 = vmatprep.subr.bf16.mxu0 0
    %71 = vmatpush1.bf16.msra.mxu0 0
    %72 = vmatprep.subr.bf16.mxu0 0
    %73 = vmatpush1.bf16.msra.mxu0 0
    %74 = vmatprep.subr.bf16.mxu0 0
    %75 = vmatpush1.bf16.msra.mxu0 0
    %76 = vmatprep.subr.bf16.mxu0 0
    %77 = vmatpush1.bf16.msra.mxu0 0
    %78 = vmatprep.subr.bf16.mxu0 0
    %79 = vmatpush1.bf16.msra.mxu0 0
    %80 = vmatprep.subr.bf16.mxu0 0
    %81 = vmatpush1.bf16.msra.mxu0 0
    %82 = vmatprep.subr.bf16.mxu0 0
    %83 = vmatpush1.bf16.msra.mxu0 0
    %84 = vmatprep.subr.bf16.mxu0 0
    %85 = vmatpush1.bf16.msra.mxu0 0
    %86 = vmatprep.subr.bf16.mxu0 0
    %87 = vmatpush1.bf16.msra.mxu0 0
    %88 = vmatprep.subr.bf16.mxu0 0
    %89 = vmatpush1.bf16.msra.mxu0 0
    %90 = vmatprep.mubr.bf16.mxu0 0
    %91 = vmatmul.mubr.bf16.gmra.mrb[0].mxu0 %v56
    %v92 = vpop.f32.mrb[0].mxu0
    %v93 = vadd.f32 0.0, %v92
    %v94 = vpop.f32.mrb[0].mxu0
    %v95 = vadd.f32 0.0, %v94
    %v96 = vpop.f32.mrb[0].mxu0
    %v97 = vadd.f32 0.0, %v96
    %v98 = vpop.f32.mrb[0].mxu0
    %v99 = vadd.f32 0.0, %v98
    %100 = vdwg.mxu0
    %v101 = vxor.u32 %v93, 2147483648
    %v102 = vxor.u32 %v97, 2147483648
    %v103 = vmul.f32 %v101, 1.442695
    %v104 = vpow.pop %v103
    %v105 = vmul.f32 %v102, 1.442695
    %v106 = vpow.pop %v105
    %v107 = vadd.f32 %v104, 1.0
    %v108 = vadd.f32 %v106, 1.0
    %v109 = vrcp.pop %v107
    %v110 = vmul.f32 1.0, %v109
    %v111 = vrcp.pop %v108
    %v112 = vmul.f32 1.0, %v111
    %v113 = vmul.f32 %v93, %v110
    %v114 = vmul.f32 %v97, %v112
    %v115 = vmul.f32 %v113, %v95
    %v116 = vmul.f32 %v114, %v99
    %v117 = vld [vmem:[#allocation2] sm:$0xff]
    %v118 = vld [vmem:[#allocation2 + $0x8] sm:$0xff]
    %v119 = vpack.c.bf16 %v116, %v115
    %v120 = vld [vmem:[%s2] sm:$0xf]
    %v121 = vld [vmem:[%s2 + $0x4] sm:$0xf]
    %v122 = vld [vmem:[%s2 + $0x8] sm:$0xf]
    %v123 = vld [vmem:[%s2 + $0xc] sm:$0xf]
    %v124 = vld [vmem:[%s2 + $0x10] sm:$0xf]
    %v125 = vld [vmem:[%s2 + $0x14] sm:$0xf]
    %v126 = vld [vmem:[%s2 + $0x18] sm:$0xf]
    %v127 = vld [vmem:[%s2 + $0x1c] sm:$0xf]
    %v128 = vld [vmem:[%s2 + $0x20] sm:$0xf]
    %v129 = vld [vmem:[%s2 + $0x24] sm:$0xf]
    %v130 = vld [vmem:[%s2 + $0x28] sm:$0xf]
    %v131 = vld [vmem:[%s2 + $0x2c] sm:$0xf]
    %v132 = vld [vmem:[%s2 + $0x30] sm:$0xf]
    %v133 = vld [vmem:[%s2 + $0x34] sm:$0xf]
    %v134 = vld [vmem:[%s2 + $0x38] sm:$0xf]
    %v135 = vld [vmem:[%s2 + $0x3c] sm:$0xf]
    %v152 = vunpack.c.l.b16 %v120
    %v153 = vunpack.c.l.b16 %v121
    %v154 = vunpack.c.l.b16 %v122
    %v155 = vunpack.c.l.b16 %v123
    %v156 = vunpack.c.l.b16 %v124
    %v157 = vunpack.c.l.b16 %v125
    %v158 = vunpack.c.l.b16 %v126
    %v159 = vunpack.c.l.b16 %v127
    %v160 = vunpack.c.l.b16 %v128
    %v161 = vunpack.c.l.b16 %v129
    %v162 = vunpack.c.l.b16 %v130
    %v163 = vunpack.c.l.b16 %v131
    %v164 = vunpack.c.l.b16 %v132
    %v165 = vunpack.c.l.b16 %v133
    %v166 = vunpack.c.l.b16 %v134
    %v167 = vunpack.c.l.b16 %v135
    %v168 = vpack.c.b16 %v153, %v152
    %v169 = vpack.c.b16 %v155, %v154
    %v170 = vpack.c.b16 %v157, %v156
    %v171 = vpack.c.b16 %v159, %v158
    %v172 = vpack.c.b16 %v161, %v160
    %v173 = vpack.c.b16 %v163, %v162
    %v174 = vpack.c.b16 %v165, %v164
    %v175 = vpack.c.b16 %v167, %v166
    %184 = vmatprep.subr.bf16.mxu0 0
    %185 = vmatpush1.bf16.msra.mxu0 %v168
    %186 = vmatprep.subr.bf16.mxu0 0
    %187 = vmatpush1.bf16.msra.mxu0 %v169
    %188 = vmatprep.subr.bf16.mxu0 0
    %189 = vmatpush1.bf16.msra.mxu0 %v170
    %190 = vmatprep.subr.bf16.mxu0 0
    %191 = vmatpush1.bf16.msra.mxu0 %v171
    %192 = vmatprep.subr.bf16.mxu0 0
    %193 = vmatpush1.bf16.msra.mxu0 %v172
    %194 = vmatprep.subr.bf16.mxu0 0
    %195 = vmatpush1.bf16.msra.mxu0 %v173
    %196 = vmatprep.subr.bf16.mxu0 0
    %197 = vmatpush1.bf16.msra.mxu0 %v174
    %198 = vmatprep.subr.bf16.mxu0 0
    %199 = vmatpush1.bf16.msra.mxu0 %v175
    %200 = vmatprep.subr.bf16.mxu0 0
    %201 = vmatpush1.bf16.msra.mxu0 0
    %202 = vmatprep.subr.bf16.mxu0 0
    %203 = vmatpush1.bf16.msra.mxu0 0
    %204 = vmatprep.subr.bf16.mxu0 0
    %205 = vmatpush1.bf16.msra.mxu0 0
    %206 = vmatprep.subr.bf16.mxu0 0
    %207 = vmatpush1.bf16.msra.mxu0 0
    %208 = vmatprep.subr.bf16.mxu0 0
    %209 = vmatpush1.bf16.msra.mxu0 0
    %210 = vmatprep.subr.bf16.mxu0 0
    %211 = vmatpush1.bf16.msra.mxu0 0
    %212 = vmatprep.subr.bf16.mxu0 0
    %213 = vmatpush1.bf16.msra.mxu0 0
    %214 = vmatprep.subr.bf16.mxu0 0
    %215 = vmatpush1.bf16.msra.mxu0 0
    %216 = vmatprep.mubr.bf16.mxu0 0
    %217 = vmatmul.mubr.bf16.gmra.mrb[0].mxu0 %v119
    %v218 = vpop.f32.mrb[0].mxu0
    %v219 = vadd.f32 0.0, %v218
    %v220 = vpop.f32.mrb[0].mxu0
    %v221 = vpop.f32.mrb[0].mxu0
    %v222 = vadd.f32 0.0, %v221
    %v223 = vpop.f32.mrb[0].mxu0
    %224 = vdwg.mxu0
    %v225 = vadd.f32 %v117, %v219
    %v226 = vadd.f32 %v118, %v222
    %227 = vst.msk [vmem:[#allocation2] sm:$0xff] %vm54, %v225
    %228 = vst.msk [vmem:[#allocation2 + $0x8] sm:$0xff] %vm54, %v226
    // Predicated region
    $region18: #{tpu_custom_call.1} parent=1 // pred_check
      %p229 = pneg %p16
    $region19: #{tpu_custom_call.1} parent=1 // pred_check_branch
      %231 = sbr.rel (%p229) target = $region21
    $region20: #{tpu_custom_call.1} parent=1 // pred_region
      %v232 = vld [vmem:[#allocation2] sm:$0xff]
      %v233 = vld [vmem:[#allocation2 + $0x8] sm:$0xff]
      %234 = vst.msk [vmem:[#allocation3] sm:$0xff] %vm54, %v232
      %235 = vst.msk [vmem:[#allocation3 + $0x8] sm:$0xff] %vm54, %v233
    $region21: #{tpu_custom_call.1} parent=1 // pred_fallthru
      _
    // Predicated region
    $region22: #{tpu_custom_call.1} parent=1 // pred_check
      _
    $region23: #{tpu_custom_call.1} parent=1 // pred_check_branch
      %237 = sbr.rel (0) target = $region25
    $region24: #{tpu_custom_call.1} parent=1 // pred_region
      %s239 = ssub.s32 256, 256
      %240 = vsyncadd [#allocation4], %s239
      %s241 = sshll.u32 [#allocation3], 4
      %s242 = int_to_ptr.vmem [resolvable:$true] %s241
      %247 = dma.vmem_to_hbm [thread:$0]  %s242, 256, %s3, [#allocation4], 128, 128, 8
    $region25: #{tpu_custom_call.1} parent=1 // pred_fallthru
      _
    // Predicated region
    $region26: #{tpu_custom_call.1} parent=1 // pred_check
      _
    $region27: #{tpu_custom_call.1} parent=1 // pred_check_branch
      %249 = sbr.rel (0) target = $region29
    $region28: #{tpu_custom_call.1} parent=1 // pred_region
      %250 = dma.done [#allocation4], 256
    $region29: #{tpu_custom_call.1} parent=1 // pred_fallthru
      _
    %251 = vsyncpa [#allocation4], 1

</llo_original>
